<compile_context>
chip_gen: v7x
topology: tpu7x:2x2x1
jax: 0.10.0
libtpu: 0.0.40
codegen_flags: <defaults>
</compile_context>

<pallas_src>
import numpy as np

import jax
import jax.numpy as jnp
from jax import lax
from jax.experimental import pallas as pl
from jax.experimental.pallas import tpu as pltpu

# ----------------------------- model config ---------------------------------
VOCAB_SIZE = 100
EMBED_DIM = 32
N_FILTERS = 8
FILTER_SIZES = (2, 3, 4)
OUTPUT_DIM = 5
PAD_IDX = 0

BATCH = 2
SEQ_LEN = 16

LANES = 128                       # lane-dense padding target
VPAD = 128                        # vocab padded to one lane tile (100 -> 128)
FS_MAX = max(FILTER_SIZES)
NEG = np.float32(-3.0e38)         # "minus infinity" for masked max-pool slots
SENTINEL = -1                     # id whose one-hot row is all zeros (tail pad)


def _up8(n):
    return -(-n // 8) * 8


B_PAD = _up8(BATCH)               # 8 rows -> unmasked stores / full sublane tile
BSP = B_PAD * SEQ_LEN             # 128 rows through the MXU

# ------------------------- slab layout (static) ------------------------------
OFF_M = 0                                     # [FS_MAX*VPAD, 128]  Emb folded into conv
OFF_BM = OFF_M + FS_MAX * VPAD                # [SEQ_LEN, 128]      bias + (-inf) mask
OFF_WFD = OFF_BM + _up8(SEQ_LEN)              # [128, 128]          fused fc @ decoder
OFF_BFD = OFF_WFD + LANES                     # [8, 128]            fused bias (row 0)
SLAB_ROWS = OFF_BFD + 8                       # 664 rows -> ~332 KiB, one DMA


# ------------------------------ Pallas kernel --------------------------------
def _cnn_kernel(ids_ref, slab_ref, out_ref):
    # ids_ref : [FS_MAX, BSP, 1] int32  tap-shifted token ids (-1 = invalid)
    # slab_ref: [SLAB_ROWS, 128] f32    all weights, packed once at init
    # out_ref : [B_PAD, 128] f32        padded logits
    iota_v = lax.broadcasted_iota(jnp.int32, (BSP, VPAD), 1)

    # one-hot per tap; lane-tile-aligned concat -> [BSP, FS_MAX*VPAD]
    taps = [(iota_v == ids_ref[i]).astype(jnp.float32) for i in range(FS_MAX)]
    x = jnp.concatenate(taps, axis=1)

    m = slab_ref[OFF_M:OFF_M + FS_MAX * VPAD, :]          # [512, 128]
    bias_mask = slab_ref[OFF_BM:OFF_BM + SEQ_LEN, :]      # [S, 128]
    wfd = slab_ref[OFF_WFD:OFF_WFD + LANES, :]            # [128, 128]
    bfd = slab_ref[OFF_BFD:OFF_BFD + 1, :]                # [1, 128]

    # embedding gather + all conv banks fused: one MXU pass
    acc = jnp.dot(x, m, preferred_element_type=jnp.float32)        # [BSP, 128]

    # vectorized bias + validity mask + global max-pool over sequence
    # (S = 16 is a multiple of 8 -> reshape stays within sublane tiles)
    acc3 = acc.reshape(B_PAD, SEQ_LEN, LANES) + bias_mask[None]    # [B_PAD,S,128]
    pooled = jnp.maximum(jnp.max(acc3, axis=1), 0.0)               # relu(max)==max(relu)

    # fused fc @ decoder
    out = jnp.dot(pooled, wfd, preferred_element_type=jnp.float32) + bfd
    out_ref[...] = out.astype(out_ref.dtype)


# ------------------ host-side weight slab (built ONCE at init) ---------------
def build_slab(params):
    """Pack all weights into one lane-dense [SLAB_ROWS, 128] f32 slab."""
    assert SEQ_LEN >= FS_MAX, "every filter needs >= 1 valid position (S >= max fs)"

    emb = np.zeros((VPAD, EMBED_DIM), np.float32)
    emb[:VOCAB_SIZE] = np.asarray(params["embedding"])

    slab = np.zeros((SLAB_ROWS, LANES), np.float32)

    # M[i*VPAD + v, :] = Emb[v] @ Wconv_tap_i  -> gather+conv become one matmul.
    # Columns >= 3*N_FILTERS and rows for taps i >= fs stay exactly zero
    # (invariant relied upon by the masked lanes downstream).
    for g, fs in enumerate(FILTER_SIZES):
        w = np.asarray(params[f"conv_w{fs}"])                  # [fs, E, F]
        c0 = g * N_FILTERS
        for i in range(fs):
            slab[OFF_M + i * VPAD:OFF_M + (i + 1) * VPAD,
                 c0:c0 + N_FILTERS] = emb @ w[i]

    # bias + validity mask: bias at valid positions, -3e38 at the invalid tail
    bm = np.zeros((SEQ_LEN, LANES), np.float32)
    for g, fs in enumerate(FILTER_SIZES):
        c0 = g * N_FILTERS
        b = np.asarray(params[f"conv_b{fs}"]).reshape(-1)
        bm[:, c0:c0 + N_FILTERS] = b[None, :]
        bm[SEQ_LEN - fs + 1:, c0:c0 + N_FILTERS] = NEG          # s > S - fs invalid
    slab[OFF_BM:OFF_BM + SEQ_LEN, :] = bm

    # fused fc -> decoder (exact because dropout is identity in eval mode)
    cat_dim = len(FILTER_SIZES) * N_FILTERS
    wfd = np.asarray(params["fc_w"]) @ np.asarray(params["dec_w"])      # [24, OUT]
    bfd = (np.asarray(params["fc_b"]) @ np.asarray(params["dec_w"])
           + np.asarray(params["dec_b"]))                               # [1, OUT]
    slab[OFF_WFD:OFF_WFD + cat_dim, :OUTPUT_DIM] = wfd
    slab[OFF_BFD, :OUTPUT_DIM] = bfd[0]

    return jnp.asarray(slab)


# ------------------------------ forward wrapper -------------------------------
@jax.jit
def cnn_forward_pallas(text, slab):
    """text: [B, S] int32 token ids; slab: prepacked weights. Returns [B, OUT]."""
    B, S = text.shape
    assert (B, S) == (BATCH, SEQ_LEN)          # kernel constants are shape-bound

    # pad batch to 8 rows with PAD tokens (unmasked output stores); sliced below
    t = jnp.pad(text.astype(jnp.int32), ((0, B_PAD - B), (0, 0)))

    # tap-shifted id planes (tiny int glue, fully fused by jit):
    #   ids[i, b*S + s] = t[b, s+i] if s+i < S else SENTINEL (-1 -> zero row)
    planes = []
    for i in range(FS_MAX):
        p = jnp.full((B_PAD, S), SENTINEL, jnp.int32)
        p = p.at[:, :S - i].set(t[:, i:])
        planes.append(p.reshape(B_PAD * S, 1))
    ids = jnp.stack(planes, axis=0)                            # [FS_MAX, BSP, 1]

    flops = 2 * BSP * (FS_MAX * VPAD) * LANES + 2 * B_PAD * LANES * LANES
    bytes_accessed = 4 * (ids.size + SLAB_ROWS * LANES + B_PAD * LANES)

    out_padded = pl.pallas_call(
        _cnn_kernel,
        out_shape=jax.ShapeDtypeStruct((B_PAD, LANES), jnp.float32),
        grid_spec=pltpu.PrefetchScalarGridSpec(
            num_scalar_prefetch=0,
            grid=(1,),
            in_specs=[pl.BlockSpec((FS_MAX, BSP, 1), lambda i: (0, 0, 0)),
                      pl.BlockSpec((SLAB_ROWS, LANES), lambda i: (0, 0))],
            out_specs=pl.BlockSpec((B_PAD, LANES), lambda i: (0, 0)),
        ),
        compiler_params=pltpu.CompilerParams(
            dimension_semantics=("arbitrary",)),
        cost_estimate=pl.CostEstimate(
            flops=flops, transcendentals=0, bytes_accessed=bytes_accessed),
    )(ids, slab)

    return out_padded[:B, :OUTPUT_DIM]


# ------------------------------- param init ----------------------------------
def init_params(key):
    params = {}
    keys = jax.random.split(key, 2 * len(FILTER_SIZES) + 5)
    k_iter = iter(keys)

    emb = 0.02 * jax.random.normal(next(k_iter), (VOCAB_SIZE, EMBED_DIM),
                                   jnp.float32)
    emb = emb.at[PAD_IDX].set(0.0)              # padding_idx row is zero
    params["embedding"] = emb

    for fs in FILTER_SIZES:
        # PyTorch conv weight [F, 1, fs, E] -> stored as [fs, E, F]
        params[f"conv_w{fs}"] = 0.1 * jax.random.normal(
            next(k_iter), (fs, EMBED_DIM, N_FILTERS), jnp.float32)
        params[f"conv_b{fs}"] = 0.01 * jax.random.normal(
            next(k_iter), (1, N_FILTERS), jnp.float32)

    cat_dim = len(FILTER_SIZES) * N_FILTERS
    params["fc_w"] = 0.1 * jax.random.normal(next(k_iter), (cat_dim, 10),
                                             jnp.float32)
    params["fc_b"] = 0.01 * jax.random.normal(next(k_iter), (1, 10),
                                              jnp.float32)
    params["dec_w"] = 0.1 * jax.random.normal(next(k_iter), (10, OUTPUT_DIM),
                                              jnp.float32)
    params["dec_b"] = 0.01 * jax.random.normal(next(k_iter), (1, OUTPUT_DIM),
                                               jnp.float32)
    return params


# ---------------------------- pure-JAX reference ------------------------------
def cnn_forward_ref(text, params):
    emb = params["embedding"][text]             # [B, S, E]
    pooled = []
    for fs in FILTER_SIZES:
        s_out = SEQ_LEN - fs + 1
        w = params[f"conv_w{fs}"]
        acc = jnp.zeros((emb.shape[0], s_out, N_FILTERS), jnp.float32)
        for i in range(fs):
            acc = acc + jnp.einsum("bse,ef->bsf", emb[:, i:i + s_out, :], w[i])
        acc = jax.nn.relu(acc + params[f"conv_b{fs}"])
        pooled.append(jnp.max(acc, axis=1))     # [B, F]
    cat = jnp.concatenate(pooled, axis=1)
    h = cat @ params["fc_w"] + params["fc_b"]
    return h @ params["dec_w"] + params["dec_b"]


# ----------------------------------- main -------------------------------------
if __name__ == "__main__":
    key = jax.random.PRNGKey(0)
    k_param, k_text = jax.random.split(key)
    params = init_params(k_param)

    # packed once (init time), reused for every forward call
    slab = build_slab(params)

    text = jax.random.randint(k_text, (BATCH, SEQ_LEN), 0, VOCAB_SIZE,
                              dtype=jnp.int32)
    text_lengths = jnp.full((BATCH,), SEQ_LEN, jnp.int32)  # unused in forward

    logits = cnn_forward_pallas(text, slab)
    logits = jax.block_until_ready(logits)

    ref = cnn_forward_ref(text, params)
    assert logits.shape == (BATCH, OUTPUT_DIM)
    assert jnp.allclose(logits, ref, atol=1e-4, rtol=1e-4)

    print("KERNEL_OK")
</pallas_src>

<mosaic_0001>
module attributes {stable_mosaic.version = 11 : i64} {
  func.func @_cnn_kernel(%arg0: i32, %arg1: memref<4x128x1xi32, #tpu.memory_space<vmem>>, %arg2: memref<664x128xf32, #tpu.memory_space<vmem>>, %arg3: memref<8x128xf32, #tpu.memory_space<vmem>>) attributes {dimension_semantics = [#tpu.dimension_semantics<arbitrary>], iteration_bounds = array<i64: 1>, scalar_prefetch = 0 : i64, scratch_operands = 0 : i64, tpu.core_type = #tpu.core_type<tc>, window_params = [{pipeline_mode = #tpu.pipeline_mode<synchronous>, transform_indices = @transform_0, window_bounds = array<i64: 4, 128, 1>}, {pipeline_mode = #tpu.pipeline_mode<synchronous>, transform_indices = @transform_1, window_bounds = array<i64: 664, 128>}, {pipeline_mode = #tpu.pipeline_mode<synchronous>, transform_indices = @transform_2, window_bounds = array<i64: 8, 128>}]} {
    %0 = tpu.iota {dimensions = array<i32: 1>} : vector<128x128xi32>
    %c0 = arith.constant 0 : index
    %c0_0 = arith.constant 0 : index
    %c0_1 = arith.constant 0 : index
    %1 = vector.load %arg1[%c0, %c0_0, %c0_1] : memref<4x128x1xi32, #tpu.memory_space<vmem>>, vector<1x128x1xi32>
    %2 = vector.shape_cast %1 : vector<1x128x1xi32> to vector<128x1xi32>
    %3 = vector.broadcast %2 : vector<128x1xi32> to vector<128x128xi32>
    %4 = arith.cmpi eq, %0, %3 : vector<128x128xi32>
    %5 = arith.extui %4 : vector<128x128xi1> to vector<128x128xi32>
    %6 = arith.sitofp %5 : vector<128x128xi32> to vector<128x128xf32>
    %c1 = arith.constant 1 : index
    %c0_2 = arith.constant 0 : index
    %c0_3 = arith.constant 0 : index
    %7 = vector.load %arg1[%c1, %c0_2, %c0_3] : memref<4x128x1xi32, #tpu.memory_space<vmem>>, vector<1x128x1xi32>
    %8 = vector.shape_cast %7 : vector<1x128x1xi32> to vector<128x1xi32>
    %9 = vector.broadcast %8 : vector<128x1xi32> to vector<128x128xi32>
    %10 = arith.cmpi eq, %0, %9 : vector<128x128xi32>
    %11 = arith.extui %10 : vector<128x128xi1> to vector<128x128xi32>
    %12 = arith.sitofp %11 : vector<128x128xi32> to vector<128x128xf32>
    %c2 = arith.constant 2 : index
    %c0_4 = arith.constant 0 : index
    %c0_5 = arith.constant 0 : index
    %13 = vector.load %arg1[%c2, %c0_4, %c0_5] : memref<4x128x1xi32, #tpu.memory_space<vmem>>, vector<1x128x1xi32>
    %14 = vector.shape_cast %13 : vector<1x128x1xi32> to vector<128x1xi32>
    %15 = vector.broadcast %14 : vector<128x1xi32> to vector<128x128xi32>
    %16 = arith.cmpi eq, %0, %15 : vector<128x128xi32>
    %17 = arith.extui %16 : vector<128x128xi1> to vector<128x128xi32>
    %18 = arith.sitofp %17 : vector<128x128xi32> to vector<128x128xf32>
    %c3 = arith.constant 3 : index
    %c0_6 = arith.constant 0 : index
    %c0_7 = arith.constant 0 : index
    %19 = vector.load %arg1[%c3, %c0_6, %c0_7] : memref<4x128x1xi32, #tpu.memory_space<vmem>>, vector<1x128x1xi32>
    %20 = vector.shape_cast %19 : vector<1x128x1xi32> to vector<128x1xi32>
    %21 = vector.broadcast %20 : vector<128x1xi32> to vector<128x128xi32>
    %22 = arith.cmpi eq, %0, %21 : vector<128x128xi32>
    %23 = arith.extui %22 : vector<128x128xi1> to vector<128x128xi32>
    %24 = arith.sitofp %23 : vector<128x128xi32> to vector<128x128xf32>
    %25 = tpu.concatenate %6, %12, %18, %24 in 1 : vector<128x128xf32>, vector<128x128xf32>, vector<128x128xf32>, vector<128x128xf32> -> vector<128x512xf32>
    %c0_8 = arith.constant 0 : index
    %c0_9 = arith.constant 0 : index
    %26 = vector.load %arg2[%c0_8, %c0_9] : memref<664x128xf32, #tpu.memory_space<vmem>>, vector<512x128xf32>
    %c512 = arith.constant 512 : index
    %c0_10 = arith.constant 0 : index
    %27 = vector.load %arg2[%c512, %c0_10] : memref<664x128xf32, #tpu.memory_space<vmem>>, vector<16x128xf32>
    %c528 = arith.constant 528 : index
    %c0_11 = arith.constant 0 : index
    %28 = vector.load %arg2[%c528, %c0_11] : memref<664x128xf32, #tpu.memory_space<vmem>>, vector<128x128xf32>
    %c656 = arith.constant 656 : index
    %c0_12 = arith.constant 0 : index
    %29 = vector.load %arg2[%c656, %c0_12] : memref<664x128xf32, #tpu.memory_space<vmem>>, vector<1x128xf32>
    %cst = arith.constant dense<0.000000e+00> : vector<128x128xf32>
    %30 = tpu.matmul %25, %26, %cst {dimension_numbers = #tpu.dot_dimension_numbers<[1], [0], [0], [1], [0, 0, 1, 1], [], []>} : vector<128x512xf32>, vector<512x128xf32>, vector<128x128xf32> -> vector<128x128xf32>
    %31 = vector.shape_cast %30 : vector<128x128xf32> to vector<8x16x128xf32>
    %32 = vector.shape_cast %27 : vector<16x128xf32> to vector<1x16x128xf32>
    %33 = vector.broadcast %32 : vector<1x16x128xf32> to vector<8x16x128xf32>
    %34 = arith.addf %31, %33 : vector<8x16x128xf32>
    %cst_13 = arith.constant dense<0xFF800000> : vector<8x128xf32>
    %35 = vector.multi_reduction <maximumf>, %34, %cst_13 [1] : vector<8x16x128xf32> to vector<8x128xf32>
    %cst_14 = arith.constant 0.000000e+00 : f32
    %36 = vector.broadcast %cst_14 : f32 to vector<8x128xf32>
    %37 = arith.maximumf %35, %36 : vector<8x128xf32>
    %cst_15 = arith.constant dense<0.000000e+00> : vector<8x128xf32>
    %38 = tpu.matmul %37, %28, %cst_15 {dimension_numbers = #tpu.dot_dimension_numbers<[1], [0], [0], [1], [0, 0, 1, 1], [], []>} : vector<8x128xf32>, vector<128x128xf32>, vector<8x128xf32> -> vector<8x128xf32>
    %39 = vector.broadcast %29 : vector<1x128xf32> to vector<8x128xf32>
    %40 = arith.addf %38, %39 : vector<8x128xf32>
    %c0_16 = arith.constant 0 : index
    %c0_17 = arith.constant 0 : index
    %41 = vector.load %arg3[%c0_16, %c0_17] : memref<8x128xf32, #tpu.memory_space<vmem>>, vector<8x128xf32>
    tpu.vector_store %arg3[%c0_16, %c0_17], %40 {strides = array<i32>} : memref<8x128xf32, #tpu.memory_space<vmem>>, vector<8x128xf32>,
    return
  }
  func.func @transform_0(%arg0: i32) -> (i32, i32, i32) {
    %c0_i32 = arith.constant 0 : i32
    %c0_i32_0 = arith.constant 0 : i32
    %c0_i32_1 = arith.constant 0 : i32
    %c0_i32_2 = arith.constant 0 : i32
    return %c0_i32, %c0_i32_0, %c0_i32_1 : i32, i32, i32
  }
  func.func @transform_1(%arg0: i32) -> (i32, i32) {
    %c0_i32 = arith.constant 0 : i32
    %c0_i32_0 = arith.constant 0 : i32
    %c0_i32_1 = arith.constant 0 : i32
    return %c0_i32, %c0_i32_0 : i32, i32
  }
  func.func @transform_2(%arg0: i32) -> (i32, i32) {
    %c0_i32 = arith.constant 0 : i32
    %c0_i32_0 = arith.constant 0 : i32
    %c0_i32_1 = arith.constant 0 : i32
    return %c0_i32, %c0_i32_0 : i32, i32
  }
}

</mosaic_0001>

<llo_original>
// kernel: cnn_forward_pallas.1
$region0: #{cnn_forward_pallas.1}
  #allocation0 [shape = 'u32[]', space=smem, size = 0x4, offset = 0x4, fixed_abs, tag = 'smem constant byte address 0x4 - core index']
  #allocation1 [shape = 'u32[144,128]{1,0:T(1,128)}', space=vmem, size = 0x12000, scoped, tag = 'internal scratch']
  %s0 = inlined_call_operand.vmem [shape: s32[4,128,1], index: 0, kind: input, shape index: {}]
  %s1 = inlined_call_operand.vmem [shape: f32[664,128], index: 1, kind: input, shape index: {}]
  %s2 = inlined_call_operand.vmem [shape: f32[8,128], index: 2, kind: output, shape index: {}]
  %s3 = sld [smem:[#allocation0]]
  $region18: #{cnn_forward_pallas.1} parent=0
    _
  %s5 = ssub.s32 1, %s3
  %s6 = scalar_select 0, %s5, %s3
  // Predicated region
  $region2: #{cnn_forward_pallas.1} parent=0 // pred_check
    _
  $region3: #{cnn_forward_pallas.1} parent=0 // pred_check_branch
    %8 = sbr.rel (0) target = $region5
  $region4: #{cnn_forward_pallas.1} parent=0 // pred_region
    _
  $region5: #{cnn_forward_pallas.1} parent=0 // pred_fallthru
    _
  // Predicated region
  $region6: #{cnn_forward_pallas.1} parent=0 // pred_check
    _
  $region7: #{cnn_forward_pallas.1} parent=0 // pred_check_branch
    %10 = sbr.rel (0) target = $region9
  $region8: #{cnn_forward_pallas.1} parent=0 // pred_region
    _
  $region9: #{cnn_forward_pallas.1} parent=0 // pred_fallthru
    _
  %v11 = vlaneseq
  %v12 = vand.u32 %v11, 127
  %v13 = vld [vmem:[%s0] sm:$0xff]
  %v14 = vld [vmem:[%s0 + $0x8] sm:$0xff]
  %v15 = vld [vmem:[%s0 + $0x10] sm:$0xff]
  %v16 = vld [vmem:[%s0 + $0x18] sm:$0xff]
  %v17 = vld [vmem:[%s0 + $0x20] sm:$0xff]
  %v18 = vld [vmem:[%s0 + $0x28] sm:$0xff]
  %v19 = vld [vmem:[%s0 + $0x30] sm:$0xff]
  %v20 = vld [vmem:[%s0 + $0x38] sm:$0xff]
  %v21 = vld [vmem:[%s0 + $0x40] sm:$0xff]
  %v22 = vld [vmem:[%s0 + $0x48] sm:$0xff]
  %v23 = vld [vmem:[%s0 + $0x50] sm:$0xff]
  %v24 = vld [vmem:[%s0 + $0x58] sm:$0xff]
  %v25 = vld [vmem:[%s0 + $0x60] sm:$0xff]
  %v26 = vld [vmem:[%s0 + $0x68] sm:$0xff]
  %v27 = vld [vmem:[%s0 + $0x70] sm:$0xff]
  %v28 = vld [vmem:[%s0 + $0x78] sm:$0xff]
  %29 = vset.pattern.permute.xlu0 0
  %30 = vperm.xlu0 %29, %v13
  %v31 = vpop.permute.xlu0 %30
  %32 = vset.pattern.permute.xlu0 0
  %33 = vperm.xlu0 %32, %v14
  %v34 = vpop.permute.xlu0 %33
  %35 = vset.pattern.permute.xlu0 0
  %36 = vperm.xlu0 %35, %v15
  %v37 = vpop.permute.xlu0 %36
  %38 = vset.pattern.permute.xlu0 0
  %39 = vperm.xlu0 %38, %v16
  %v40 = vpop.permute.xlu0 %39
  %41 = vset.pattern.permute.xlu0 0
  %42 = vperm.xlu0 %41, %v17
  %v43 = vpop.permute.xlu0 %42
  %44 = vset.pattern.permute.xlu0 0
  %45 = vperm.xlu0 %44, %v18
  %v46 = vpop.permute.xlu0 %45
  %47 = vset.pattern.permute.xlu0 0
  %48 = vperm.xlu0 %47, %v19
  %v49 = vpop.permute.xlu0 %48
  %50 = vset.pattern.permute.xlu0 0
  %51 = vperm.xlu0 %50, %v20
  %v52 = vpop.permute.xlu0 %51
  %53 = vset.pattern.permute.xlu0 0
  %54 = vperm.xlu0 %53, %v21
  %v55 = vpop.permute.xlu0 %54
  %56 = vset.pattern.permute.xlu0 0
  %57 = vperm.xlu0 %56, %v22
  %v58 = vpop.permute.xlu0 %57
  %59 = vset.pattern.permute.xlu0 0
  %60 = vperm.xlu0 %59, %v23
  %v61 = vpop.permute.xlu0 %60
  %62 = vset.pattern.permute.xlu0 0
  %63 = vperm.xlu0 %62, %v24
  %v64 = vpop.permute.xlu0 %63
  %65 = vset.pattern.permute.xlu0 0
  %66 = vperm.xlu0 %65, %v25
  %v67 = vpop.permute.xlu0 %66
  %68 = vset.pattern.permute.xlu0 0
  %69 = vperm.xlu0 %68, %v26
  %v70 = vpop.permute.xlu0 %69
  %71 = vset.pattern.permute.xlu0 0
  %72 = vperm.xlu0 %71, %v27
  %v73 = vpop.permute.xlu0 %72
  %74 = vset.pattern.permute.xlu0 0
  %75 = vperm.xlu0 %74, %v28
  %v76 = vpop.permute.xlu0 %75
  %vm77 = vcmp.eq.s32.totalorder %v12, %v31
  %vm78 = vcmp.eq.s32.totalorder %v12, %v34
  %vm79 = vcmp.eq.s32.totalorder %v12, %v37
  %vm80 = vcmp.eq.s32.totalorder %v12, %v40
  %vm81 = vcmp.eq.s32.totalorder %v12, %v43
  %vm82 = vcmp.eq.s32.totalorder %v12, %v46
  %vm83 = vcmp.eq.s32.totalorder %v12, %v49
  %vm84 = vcmp.eq.s32.totalorder %v12, %v52
  %vm85 = vcmp.eq.s32.totalorder %v12, %v55
  %vm86 = vcmp.eq.s32.totalorder %v12, %v58
  %vm87 = vcmp.eq.s32.totalorder %v12, %v61
  %vm88 = vcmp.eq.s32.totalorder %v12, %v64
  %vm89 = vcmp.eq.s32.totalorder %v12, %v67
  %vm90 = vcmp.eq.s32.totalorder %v12, %v70
  %vm91 = vcmp.eq.s32.totalorder %v12, %v73
  %vm92 = vcmp.eq.s32.totalorder %v12, %v76
  %v93 = vsel %vm77, 1, 0
  %v94 = vsel %vm78, 1, 0
  %v95 = vsel %vm79, 1, 0
  %v96 = vsel %vm80, 1, 0
  %v97 = vsel %vm81, 1, 0
  %v98 = vsel %vm82, 1, 0
  %v99 = vsel %vm83, 1, 0
  %v100 = vsel %vm84, 1, 0
  %v101 = vsel %vm85, 1, 0
  %v102 = vsel %vm86, 1, 0
  %v103 = vsel %vm87, 1, 0
  %v104 = vsel %vm88, 1, 0
  %v105 = vsel %vm89, 1, 0
  %v106 = vsel %vm90, 1, 0
  %v107 = vsel %vm91, 1, 0
  %v108 = vsel %vm92, 1, 0
  %v109 = vcvt.s32.f32 %v93
  %v110 = vcvt.s32.f32 %v94
  %v111 = vcvt.s32.f32 %v95
  %v112 = vcvt.s32.f32 %v96
  %v113 = vcvt.s32.f32 %v97
  %v114 = vcvt.s32.f32 %v98
  %v115 = vcvt.s32.f32 %v99
  %v116 = vcvt.s32.f32 %v100
  %v117 = vcvt.s32.f32 %v101
  %v118 = vcvt.s32.f32 %v102
  %v119 = vcvt.s32.f32 %v103
  %v120 = vcvt.s32.f32 %v104
  %v121 = vcvt.s32.f32 %v105
  %v122 = vcvt.s32.f32 %v106
  %v123 = vcvt.s32.f32 %v107
  %v124 = vcvt.s32.f32 %v108
  %s125 = scalar_lea.vmem %s0, 128
  %v126 = vld [vmem:[%s125] sm:$0xff]
  %v127 = vld [vmem:[%s125 + $0x8] sm:$0xff]
  %v128 = vld [vmem:[%s125 + $0x10] sm:$0xff]
  %v129 = vld [vmem:[%s125 + $0x18] sm:$0xff]
  %v130 = vld [vmem:[%s125 + $0x20] sm:$0xff]
  %v131 = vld [vmem:[%s125 + $0x28] sm:$0xff]
  %v132 = vld [vmem:[%s125 + $0x30] sm:$0xff]
  %v133 = vld [vmem:[%s125 + $0x38] sm:$0xff]
  %v134 = vld [vmem:[%s125 + $0x40] sm:$0xff]
  %v135 = vld [vmem:[%s125 + $0x48] sm:$0xff]
  %v136 = vld [vmem:[%s125 + $0x50] sm:$0xff]
  %v137 = vld [vmem:[%s125 + $0x58] sm:$0xff]
  %v138 = vld [vmem:[%s125 + $0x60] sm:$0xff]
  %v139 = vld [vmem:[%s125 + $0x68] sm:$0xff]
  %v140 = vld [vmem:[%s125 + $0x70] sm:$0xff]
  %v141 = vld [vmem:[%s125 + $0x78] sm:$0xff]
  %142 = vset.pattern.permute.xlu0 0
  %143 = vperm.xlu0 %142, %v126
  %v144 = vpop.permute.xlu0 %143
  %145 = vset.pattern.permute.xlu0 0
  %146 = vperm.xlu0 %145, %v127
  %v147 = vpop.permute.xlu0 %146
  %148 = vset.pattern.permute.xlu0 0
  %149 = vperm.xlu0 %148, %v128
  %v150 = vpop.permute.xlu0 %149
  %151 = vset.pattern.permute.xlu0 0
  %152 = vperm.xlu0 %151, %v129
  %v153 = vpop.permute.xlu0 %152
  %154 = vset.pattern.permute.xlu0 0
  %155 = vperm.xlu0 %154, %v130
  %v156 = vpop.permute.xlu0 %155
  %157 = vset.pattern.permute.xlu0 0
  %158 = vperm.xlu0 %157, %v131
  %v159 = vpop.permute.xlu0 %158
  %160 = vset.pattern.permute.xlu0 0
  %161 = vperm.xlu0 %160, %v132
  %v162 = vpop.permute.xlu0 %161
  %163 = vset.pattern.permute.xlu0 0
  %164 = vperm.xlu0 %163, %v133
  %v165 = vpop.permute.xlu0 %164
  %166 = vset.pattern.permute.xlu0 0
  %167 = vperm.xlu0 %166, %v134
  %v168 = vpop.permute.xlu0 %167
  %169 = vset.pattern.permute.xlu0 0
  %170 = vperm.xlu0 %169, %v135
  %v171 = vpop.permute.xlu0 %170
  %172 = vset.pattern.permute.xlu0 0
  %173 = vperm.xlu0 %172, %v136
  %v174 = vpop.permute.xlu0 %173
  %175 = vset.pattern.permute.xlu0 0
  %176 = vperm.xlu0 %175, %v137
  %v177 = vpop.permute.xlu0 %176
  %178 = vset.pattern.permute.xlu0 0
  %179 = vperm.xlu0 %178, %v138
  %v180 = vpop.permute.xlu0 %179
  %181 = vset.pattern.permute.xlu0 0
  %182 = vperm.xlu0 %181, %v139
  %v183 = vpop.permute.xlu0 %182
  %184 = vset.pattern.permute.xlu0 0
  %185 = vperm.xlu0 %184, %v140
  %v186 = vpop.permute.xlu0 %185
  %187 = vset.pattern.permute.xlu0 0
  %188 = vperm.xlu0 %187, %v141
  %v189 = vpop.permute.xlu0 %188
  %vm190 = vcmp.eq.s32.totalorder %v12, %v144
  %vm191 = vcmp.eq.s32.totalorder %v12, %v147
  %vm192 = vcmp.eq.s32.totalorder %v12, %v150
  %vm193 = vcmp.eq.s32.totalorder %v12, %v153
  %vm194 = vcmp.eq.s32.totalorder %v12, %v156
  %vm195 = vcmp.eq.s32.totalorder %v12, %v159
  %vm196 = vcmp.eq.s32.totalorder %v12, %v162
  %vm197 = vcmp.eq.s32.totalorder %v12, %v165
  %vm198 = vcmp.eq.s32.totalorder %v12, %v168
  %vm199 = vcmp.eq.s32.totalorder %v12, %v171
  %vm200 = vcmp.eq.s32.totalorder %v12, %v174
  %vm201 = vcmp.eq.s32.totalorder %v12, %v177
  %vm202 = vcmp.eq.s32.totalorder %v12, %v180
  %vm203 = vcmp.eq.s32.totalorder %v12, %v183
  %vm204 = vcmp.eq.s32.totalorder %v12, %v186
  %vm205 = vcmp.eq.s32.totalorder %v12, %v189
  %v206 = vsel %vm190, 1, 0
  %v207 = vsel %vm191, 1, 0
  %v208 = vsel %vm192, 1, 0
  %v209 = vsel %vm193, 1, 0
  %v210 = vsel %vm194, 1, 0
  %v211 = vsel %vm195, 1, 0
  %v212 = vsel %vm196, 1, 0
  %v213 = vsel %vm197, 1, 0
  %v214 = vsel %vm198, 1, 0
  %v215 = vsel %vm199, 1, 0
  %v216 = vsel %vm200, 1, 0
  %v217 = vsel %vm201, 1, 0
  %v218 = vsel %vm202, 1, 0
  %v219 = vsel %vm203, 1, 0
  %v220 = vsel %vm204, 1, 0
  %v221 = vsel %vm205, 1, 0
  %v222 = vcvt.s32.f32 %v206
  %v223 = vcvt.s32.f32 %v207
  %v224 = vcvt.s32.f32 %v208
  %v225 = vcvt.s32.f32 %v209
  %v226 = vcvt.s32.f32 %v210
  %v227 = vcvt.s32.f32 %v211
  %v228 = vcvt.s32.f32 %v212
  %v229 = vcvt.s32.f32 %v213
  %v230 = vcvt.s32.f32 %v214
  %v231 = vcvt.s32.f32 %v215
  %v232 = vcvt.s32.f32 %v216
  %v233 = vcvt.s32.f32 %v217
  %v234 = vcvt.s32.f32 %v218
  %v235 = vcvt.s32.f32 %v219
  %v236 = vcvt.s32.f32 %v220
  %v237 = vcvt.s32.f32 %v221
  %s238 = scalar_lea.vmem %s0, 256
  %v239 = vld [vmem:[%s238] sm:$0xff]
  %v240 = vld [vmem:[%s238 + $0x8] sm:$0xff]
  %v241 = vld [vmem:[%s238 + $0x10] sm:$0xff]
  %v242 = vld [vmem:[%s238 + $0x18] sm:$0xff]
  %v243 = vld [vmem:[%s238 + $0x20] sm:$0xff]
  %v244 = vld [vmem:[%s238 + $0x28] sm:$0xff]
  %v245 = vld [vmem:[%s238 + $0x30] sm:$0xff]
  %v246 = vld [vmem:[%s238 + $0x38] sm:$0xff]
  %v247 = vld [vmem:[%s238 + $0x40] sm:$0xff]
  %v248 = vld [vmem:[%s238 + $0x48] sm:$0xff]
  %v249 = vld [vmem:[%s238 + $0x50] sm:$0xff]
  %v250 = vld [vmem:[%s238 + $0x58] sm:$0xff]
  %v251 = vld [vmem:[%s238 + $0x60] sm:$0xff]
  %v252 = vld [vmem:[%s238 + $0x68] sm:$0xff]
  %v253 = vld [vmem:[%s238 + $0x70] sm:$0xff]
  %v254 = vld [vmem:[%s238 + $0x78] sm:$0xff]
  %255 = vset.pattern.permute.xlu0 0
  %256 = vperm.xlu0 %255, %v239
  %v257 = vpop.permute.xlu0 %256
  %258 = vset.pattern.permute.xlu0 0
  %259 = vperm.xlu0 %258, %v240
  %v260 = vpop.permute.xlu0 %259
  %261 = vset.pattern.permute.xlu0 0
  %262 = vperm.xlu0 %261, %v241
  %v263 = vpop.permute.xlu0 %262
  %264 = vset.pattern.permute.xlu0 0
  %265 = vperm.xlu0 %264, %v242
  %v266 = vpop.permute.xlu0 %265
  %267 = vset.pattern.permute.xlu0 0
  %268 = vperm.xlu0 %267, %v243
  %v269 = vpop.permute.xlu0 %268
  %270 = vset.pattern.permute.xlu0 0
  %271 = vperm.xlu0 %270, %v244
  %v272 = vpop.permute.xlu0 %271
  %273 = vset.pattern.permute.xlu0 0
  %274 = vperm.xlu0 %273, %v245
  %v275 = vpop.permute.xlu0 %274
  %276 = vset.pattern.permute.xlu0 0
  %277 = vperm.xlu0 %276, %v246
  %v278 = vpop.permute.xlu0 %277
  %279 = vset.pattern.permute.xlu0 0
  %280 = vperm.xlu0 %279, %v247
  %v281 = vpop.permute.xlu0 %280
  %282 = vset.pattern.permute.xlu0 0
  %283 = vperm.xlu0 %282, %v248
  %v284 = vpop.permute.xlu0 %283
  %285 = vset.pattern.permute.xlu0 0
  %286 = vperm.xlu0 %285, %v249
  %v287 = vpop.permute.xlu0 %286
  %288 = vset.pattern.permute.xlu0 0
  %289 = vperm.xlu0 %288, %v250
  %v290 = vpop.permute.xlu0 %289
  %291 = vset.pattern.permute.xlu0 0
  %292 = vperm.xlu0 %291, %v251
  %v293 = vpop.permute.xlu0 %292
  %294 = vset.pattern.permute.xlu0 0
  %295 = vperm.xlu0 %294, %v252
  %v296 = vpop.permute.xlu0 %295
  %297 = vset.pattern.permute.xlu0 0
  %298 = vperm.xlu0 %297, %v253
  %v299 = vpop.permute.xlu0 %298
  %300 = vset.pattern.permute.xlu0 0
  %301 = vperm.xlu0 %300, %v254
  %v302 = vpop.permute.xlu0 %301
  %vm303 = vcmp.eq.s32.totalorder %v12, %v257
  %vm304 = vcmp.eq.s32.totalorder %v12, %v260
  %vm305 = vcmp.eq.s32.totalorder %v12, %v263
  %vm306 = vcmp.eq.s32.totalorder %v12, %v266
  %vm307 = vcmp.eq.s32.totalorder %v12, %v269
  %vm308 = vcmp.eq.s32.totalorder %v12, %v272
  %vm309 = vcmp.eq.s32.totalorder %v12, %v275
  %vm310 = vcmp.eq.s32.totalorder %v12, %v278
  %vm311 = vcmp.eq.s32.totalorder %v12, %v281
  %vm312 = vcmp.eq.s32.totalorder %v12, %v284
  %vm313 = vcmp.eq.s32.totalorder %v12, %v287
  %vm314 = vcmp.eq.s32.totalorder %v12, %v290
  %vm315 = vcmp.eq.s32.totalorder %v12, %v293
  %vm316 = vcmp.eq.s32.totalorder %v12, %v296
  %vm317 = vcmp.eq.s32.totalorder %v12, %v299
  %vm318 = vcmp.eq.s32.totalorder %v12, %v302
  %v319 = vsel %vm303, 1, 0
  %v320 = vsel %vm304, 1, 0
  %v321 = vsel %vm305, 1, 0
  %v322 = vsel %vm306, 1, 0
  %v323 = vsel %vm307, 1, 0
  %v324 = vsel %vm308, 1, 0
  %v325 = vsel %vm309, 1, 0
  %v326 = vsel %vm310, 1, 0
  %v327 = vsel %vm311, 1, 0
  %v328 = vsel %vm312, 1, 0
  %v329 = vsel %vm313, 1, 0
  %v330 = vsel %vm314, 1, 0
  %v331 = vsel %vm315, 1, 0
  %v332 = vsel %vm316, 1, 0
  %v333 = vsel %vm317, 1, 0
  %v334 = vsel %vm318, 1, 0
  %v335 = vcvt.s32.f32 %v319
  %v336 = vcvt.s32.f32 %v320
  %v337 = vcvt.s32.f32 %v321
  %v338 = vcvt.s32.f32 %v322
  %v339 = vcvt.s32.f32 %v323
  %v340 = vcvt.s32.f32 %v324
  %v341 = vcvt.s32.f32 %v325
  %v342 = vcvt.s32.f32 %v326
  %v343 = vcvt.s32.f32 %v327
  %v344 = vcvt.s32.f32 %v328
  %v345 = vcvt.s32.f32 %v329
  %v346 = vcvt.s32.f32 %v330
  %v347 = vcvt.s32.f32 %v331
  %v348 = vcvt.s32.f32 %v332
  %v349 = vcvt.s32.f32 %v333
  %v350 = vcvt.s32.f32 %v334
  %s351 = scalar_lea.vmem %s0, 384
  %v352 = vld [vmem:[%s351] sm:$0xff]
  %v353 = vld [vmem:[%s351 + $0x8] sm:$0xff]
  %v354 = vld [vmem:[%s351 + $0x10] sm:$0xff]
  %v355 = vld [vmem:[%s351 + $0x18] sm:$0xff]
  %v356 = vld [vmem:[%s351 + $0x20] sm:$0xff]
  %v357 = vld [vmem:[%s351 + $0x28] sm:$0xff]
  %v358 = vld [vmem:[%s351 + $0x30] sm:$0xff]
  %v359 = vld [vmem:[%s351 + $0x38] sm:$0xff]
  %v360 = vld [vmem:[%s351 + $0x40] sm:$0xff]
  %v361 = vld [vmem:[%s351 + $0x48] sm:$0xff]
  %v362 = vld [vmem:[%s351 + $0x50] sm:$0xff]
  %v363 = vld [vmem:[%s351 + $0x58] sm:$0xff]
  %v364 = vld [vmem:[%s351 + $0x60] sm:$0xff]
  %v365 = vld [vmem:[%s351 + $0x68] sm:$0xff]
  %v366 = vld [vmem:[%s351 + $0x70] sm:$0xff]
  %v367 = vld [vmem:[%s351 + $0x78] sm:$0xff]
  %368 = vset.pattern.permute.xlu0 0
  %369 = vperm.xlu0 %368, %v352
  %v370 = vpop.permute.xlu0 %369
  %371 = vset.pattern.permute.xlu0 0
  %372 = vperm.xlu0 %371, %v353
  %v373 = vpop.permute.xlu0 %372
  %374 = vset.pattern.permute.xlu0 0
  %375 = vperm.xlu0 %374, %v354
  %v376 = vpop.permute.xlu0 %375
  %377 = vset.pattern.permute.xlu0 0
  %378 = vperm.xlu0 %377, %v355
  %v379 = vpop.permute.xlu0 %378
  %380 = vset.pattern.permute.xlu0 0
  %381 = vperm.xlu0 %380, %v356
  %v382 = vpop.permute.xlu0 %381
  %383 = vset.pattern.permute.xlu0 0
  %384 = vperm.xlu0 %383, %v357
  %v385 = vpop.permute.xlu0 %384
  %386 = vset.pattern.permute.xlu0 0
  %387 = vperm.xlu0 %386, %v358
  %v388 = vpop.permute.xlu0 %387
  %389 = vset.pattern.permute.xlu0 0
  %390 = vperm.xlu0 %389, %v359
  %v391 = vpop.permute.xlu0 %390
  %392 = vset.pattern.permute.xlu0 0
  %393 = vperm.xlu0 %392, %v360
  %v394 = vpop.permute.xlu0 %393
  %395 = vset.pattern.permute.xlu0 0
  %396 = vperm.xlu0 %395, %v361
  %v397 = vpop.permute.xlu0 %396
  %398 = vset.pattern.permute.xlu0 0
  %399 = vperm.xlu0 %398, %v362
  %v400 = vpop.permute.xlu0 %399
  %401 = vset.pattern.permute.xlu0 0
  %402 = vperm.xlu0 %401, %v363
  %v403 = vpop.permute.xlu0 %402
  %404 = vset.pattern.permute.xlu0 0
  %405 = vperm.xlu0 %404, %v364
  %v406 = vpop.permute.xlu0 %405
  %407 = vset.pattern.permute.xlu0 0
  %408 = vperm.xlu0 %407, %v365
  %v409 = vpop.permute.xlu0 %408
  %410 = vset.pattern.permute.xlu0 0
  %411 = vperm.xlu0 %410, %v366
  %v412 = vpop.permute.xlu0 %411
  %413 = vset.pattern.permute.xlu0 0
  %414 = vperm.xlu0 %413, %v367
  %v415 = vpop.permute.xlu0 %414
  %vm416 = vcmp.eq.s32.totalorder %v12, %v370
  %vm417 = vcmp.eq.s32.totalorder %v12, %v373
  %vm418 = vcmp.eq.s32.totalorder %v12, %v376
  %vm419 = vcmp.eq.s32.totalorder %v12, %v379
  %vm420 = vcmp.eq.s32.totalorder %v12, %v382
  %vm421 = vcmp.eq.s32.totalorder %v12, %v385
  %vm422 = vcmp.eq.s32.totalorder %v12, %v388
  %vm423 = vcmp.eq.s32.totalorder %v12, %v391
  %vm424 = vcmp.eq.s32.totalorder %v12, %v394
  %vm425 = vcmp.eq.s32.totalorder %v12, %v397
  %vm426 = vcmp.eq.s32.totalorder %v12, %v400
  %vm427 = vcmp.eq.s32.totalorder %v12, %v403
  %vm428 = vcmp.eq.s32.totalorder %v12, %v406
  %vm429 = vcmp.eq.s32.totalorder %v12, %v409
  %vm430 = vcmp.eq.s32.totalorder %v12, %v412
  %vm431 = vcmp.eq.s32.totalorder %v12, %v415
  %v432 = vsel %vm416, 1, 0
  %v433 = vsel %vm417, 1, 0
  %v434 = vsel %vm418, 1, 0
  %v435 = vsel %vm419, 1, 0
  %v436 = vsel %vm420, 1, 0
  %v437 = vsel %vm421, 1, 0
  %v438 = vsel %vm422, 1, 0
  %v439 = vsel %vm423, 1, 0
  %v440 = vsel %vm424, 1, 0
  %v441 = vsel %vm425, 1, 0
  %v442 = vsel %vm426, 1, 0
  %v443 = vsel %vm427, 1, 0
  %v444 = vsel %vm428, 1, 0
  %v445 = vsel %vm429, 1, 0
  %v446 = vsel %vm430, 1, 0
  %v447 = vsel %vm431, 1, 0
  %v448 = vcvt.s32.f32 %v432
  %v449 = vcvt.s32.f32 %v433
  %v450 = vcvt.s32.f32 %v434
  %v451 = vcvt.s32.f32 %v435
  %v452 = vcvt.s32.f32 %v436
  %v453 = vcvt.s32.f32 %v437
  %v454 = vcvt.s32.f32 %v438
  %v455 = vcvt.s32.f32 %v439
  %v456 = vcvt.s32.f32 %v440
  %v457 = vcvt.s32.f32 %v441
  %v458 = vcvt.s32.f32 %v442
  %v459 = vcvt.s32.f32 %v443
  %v460 = vcvt.s32.f32 %v444
  %v461 = vcvt.s32.f32 %v445
  %v462 = vcvt.s32.f32 %v446
  %v463 = vcvt.s32.f32 %v447
  %v464 = vld [vmem:[%s1] sm:$0xff]
  %v465 = vld [vmem:[%s1 + $0x8] sm:$0xff]
  %v466 = vld [vmem:[%s1 + $0x10] sm:$0xff]
  %v467 = vld [vmem:[%s1 + $0x18] sm:$0xff]
  %v468 = vld [vmem:[%s1 + $0x20] sm:$0xff]
  %v469 = vld [vmem:[%s1 + $0x28] sm:$0xff]
  %v470 = vld [vmem:[%s1 + $0x30] sm:$0xff]
  %v471 = vld [vmem:[%s1 + $0x38] sm:$0xff]
  %v472 = vld [vmem:[%s1 + $0x40] sm:$0xff]
  %v473 = vld [vmem:[%s1 + $0x48] sm:$0xff]
  %v474 = vld [vmem:[%s1 + $0x50] sm:$0xff]
  %v475 = vld [vmem:[%s1 + $0x58] sm:$0xff]
  %v476 = vld [vmem:[%s1 + $0x60] sm:$0xff]
  %v477 = vld [vmem:[%s1 + $0x68] sm:$0xff]
  %v478 = vld [vmem:[%s1 + $0x70] sm:$0xff]
  %v479 = vld [vmem:[%s1 + $0x78] sm:$0xff]
  %v480 = vld [vmem:[%s1 + $0x80] sm:$0xff]
  %v481 = vld [vmem:[%s1 + $0x88] sm:$0xff]
  %v482 = vld [vmem:[%s1 + $0x90] sm:$0xff]
  %v483 = vld [vmem:[%s1 + $0x98] sm:$0xff]
  %v484 = vld [vmem:[%s1 + $0xa0] sm:$0xff]
  %v485 = vld [vmem:[%s1 + $0xa8] sm:$0xff]
  %v486 = vld [vmem:[%s1 + $0xb0] sm:$0xff]
  %v487 = vld [vmem:[%s1 + $0xb8] sm:$0xff]
  %v488 = vld [vmem:[%s1 + $0xc0] sm:$0xff]
  %v489 = vld [vmem:[%s1 + $0xc8] sm:$0xff]
  %v490 = vld [vmem:[%s1 + $0xd0] sm:$0xff]
  %v491 = vld [vmem:[%s1 + $0xd8] sm:$0xff]
  %v492 = vld [vmem:[%s1 + $0xe0] sm:$0xff]
  %v493 = vld [vmem:[%s1 + $0xe8] sm:$0xff]
  %v494 = vld [vmem:[%s1 + $0xf0] sm:$0xff]
  %v495 = vld [vmem:[%s1 + $0xf8] sm:$0xff]
  %v496 = vld [vmem:[%s1 + $0x100] sm:$0xff]
  %v497 = vld [vmem:[%s1 + $0x108] sm:$0xff]
  %v498 = vld [vmem:[%s1 + $0x110] sm:$0xff]
  %v499 = vld [vmem:[%s1 + $0x118] sm:$0xff]
  %v500 = vld [vmem:[%s1 + $0x120] sm:$0xff]
  %v501 = vld [vmem:[%s1 + $0x128] sm:$0xff]
  %v502 = vld [vmem:[%s1 + $0x130] sm:$0xff]
  %v503 = vld [vmem:[%s1 + $0x138] sm:$0xff]
  %v504 = vld [vmem:[%s1 + $0x140] sm:$0xff]
  %v505 = vld [vmem:[%s1 + $0x148] sm:$0xff]
  %v506 = vld [vmem:[%s1 + $0x150] sm:$0xff]
  %v507 = vld [vmem:[%s1 + $0x158] sm:$0xff]
  %v508 = vld [vmem:[%s1 + $0x160] sm:$0xff]
  %v509 = vld [vmem:[%s1 + $0x168] sm:$0xff]
  %v510 = vld [vmem:[%s1 + $0x170] sm:$0xff]
  %v511 = vld [vmem:[%s1 + $0x178] sm:$0xff]
  %v512 = vld [vmem:[%s1 + $0x180] sm:$0xff]
  %v513 = vld [vmem:[%s1 + $0x188] sm:$0xff]
  %v514 = vld [vmem:[%s1 + $0x190] sm:$0xff]
  %v515 = vld [vmem:[%s1 + $0x198] sm:$0xff]
  %v516 = vld [vmem:[%s1 + $0x1a0] sm:$0xff]
  %v517 = vld [vmem:[%s1 + $0x1a8] sm:$0xff]
  %v518 = vld [vmem:[%s1 + $0x1b0] sm:$0xff]
  %v519 = vld [vmem:[%s1 + $0x1b8] sm:$0xff]
  %v520 = vld [vmem:[%s1 + $0x1c0] sm:$0xff]
  %v521 = vld [vmem:[%s1 + $0x1c8] sm:$0xff]
  %v522 = vld [vmem:[%s1 + $0x1d0] sm:$0xff]
  %v523 = vld [vmem:[%s1 + $0x1d8] sm:$0xff]
  %v524 = vld [vmem:[%s1 + $0x1e0] sm:$0xff]
  %v525 = vld [vmem:[%s1 + $0x1e8] sm:$0xff]
  %v526 = vld [vmem:[%s1 + $0x1f0] sm:$0xff]
  %v527 = vld [vmem:[%s1 + $0x1f8] sm:$0xff]
  %v528 = vld [vmem:[%s1 + $0x200] sm:$0xff]
  %v529 = vld [vmem:[%s1 + $0x208] sm:$0xff]
  %v530 = vld [vmem:[%s1 + $0x210] sm:$0xff]
  %v531 = vld [vmem:[%s1 + $0x218] sm:$0xff]
  %v532 = vld [vmem:[%s1 + $0x220] sm:$0xff]
  %v533 = vld [vmem:[%s1 + $0x228] sm:$0xff]
  %v534 = vld [vmem:[%s1 + $0x230] sm:$0xff]
  %v535 = vld [vmem:[%s1 + $0x238] sm:$0xff]
  %v536 = vld [vmem:[%s1 + $0x240] sm:$0xff]
  %v537 = vld [vmem:[%s1 + $0x248] sm:$0xff]
  %v538 = vld [vmem:[%s1 + $0x250] sm:$0xff]
  %v539 = vld [vmem:[%s1 + $0x258] sm:$0xff]
  %v540 = vld [vmem:[%s1 + $0x260] sm:$0xff]
  %v541 = vld [vmem:[%s1 + $0x268] sm:$0xff]
  %v542 = vld [vmem:[%s1 + $0x270] sm:$0xff]
  %v543 = vld [vmem:[%s1 + $0x278] sm:$0xff]
  %v544 = vld [vmem:[%s1 + $0x280] sm:$0xff]
  %v545 = vld [vmem:[%s1 + $0x288] sm:$0xff]
  %v546 = vld [vmem:[%s1 + $0x290] sm:$0x1]
  %547 = vmatprep.subr.mxu0 0.0
  %548 = vmatpush1.msra.mxu0 %v464
  %549 = vmatprep.subr.mxu0 0.0
  %550 = vmatpush1.msra.mxu0 %v465
  %551 = vmatprep.subr.mxu0 0.0
  %552 = vmatpush1.msra.mxu0 %v466
  %553 = vmatprep.subr.mxu0 0.0
  %554 = vmatpush1.msra.mxu0 %v467
  %555 = vmatprep.subr.mxu0 0.0
  %556 = vmatpush1.msra.mxu0 %v468
  %557 = vmatprep.subr.mxu0 0.0
  %558 = vmatpush1.msra.mxu0 %v469
  %559 = vmatprep.subr.mxu0 0.0
  %560 = vmatpush1.msra.mxu0 %v470
  %561 = vmatprep.subr.mxu0 0.0
  %562 = vmatpush1.msra.mxu0 %v471
  %563 = vmatprep.subr.mxu0 0.0
  %564 = vmatpush1.msra.mxu0 %v472
  %565 = vmatprep.subr.mxu0 0.0
  %566 = vmatpush1.msra.mxu0 %v473
  %567 = vmatprep.subr.mxu0 0.0
  %568 = vmatpush1.msra.mxu0 %v474
  %569 = vmatprep.subr.mxu0 0.0
  %570 = vmatpush1.msra.mxu0 %v475
  %571 = vmatprep.subr.mxu0 0.0
  %572 = vmatpush1.msra.mxu0 %v476
  %573 = vmatprep.subr.mxu0 0.0
  %574 = vmatpush1.msra.mxu0 %v477
  %575 = vmatprep.subr.mxu0 0.0
  %576 = vmatpush1.msra.mxu0 %v478
  %577 = vmatprep.subr.mxu0 0.0
  %578 = vmatpush1.msra.mxu0 %v479
  %579 = vmatprep.subr.mxu0 0.0
  %580 = vmatpush1.msra.mxu0 %v480
  %581 = vmatprep.subr.mxu0 0.0
  %582 = vmatpush1.msra.mxu0 %v481
  %583 = vmatprep.subr.mxu0 0.0
  %584 = vmatpush1.msra.mxu0 %v482
  %585 = vmatprep.subr.mxu0 0.0
  %586 = vmatpush1.msra.mxu0 %v483
  %587 = vmatprep.subr.mxu0 0.0
  %588 = vmatpush1.msra.mxu0 %v484
  %589 = vmatprep.subr.mxu0 0.0
  %590 = vmatpush1.msra.mxu0 %v485
  %591 = vmatprep.subr.mxu0 0.0
  %592 = vmatpush1.msra.mxu0 %v486
  %593 = vmatprep.subr.mxu0 0.0
  %594 = vmatpush1.msra.mxu0 %v487
  %595 = vmatprep.subr.mxu0 0.0
  %596 = vmatpush1.msra.mxu0 %v488
  %597 = vmatprep.subr.mxu0 0.0
  %598 = vmatpush1.msra.mxu0 %v489
  %599 = vmatprep.subr.mxu0 0.0
  %600 = vmatpush1.msra.mxu0 %v490
  %601 = vmatprep.subr.mxu0 0.0
  %602 = vmatpush1.msra.mxu0 %v491
  %603 = vmatprep.subr.mxu0 0.0
  %604 = vmatpush1.msra.mxu0 %v492
  %605 = vmatprep.subr.mxu0 0.0
  %606 = vmatpush1.msra.mxu0 %v493
  %607 = vmatprep.subr.mxu0 0.0
  %608 = vmatpush1.msra.mxu0 %v494
  %609 = vmatprep.subr.mxu0 0.0
  %610 = vmatpush1.msra.mxu0 %v495
  %611 = vmatprep.mubr.f32.mxu0 %v222
  %612 = vmatmul.mubr.f32.gmra.mrb[0].mxu0 %v109
  %v613 = vpop.f32.mrb[0].mxu0
  %v614 = vadd.f32 0.0, %v613
  %v615 = vpop.f32.mrb[0].mxu0
  %616 = vmatprep.mubr.f32.mxu0 %v223
  %617 = vmatmul.mubr.f32.gmra.mrb[0].mxu0 %v110
  %v618 = vpop.f32.mrb[0].mxu0
  %v619 = vadd.f32 0.0, %v618
  %v620 = vpop.f32.mrb[0].mxu0
  %621 = vmatprep.mubr.f32.mxu0 %v224
  %622 = vmatmul.mubr.f32.gmra.mrb[0].mxu0 %v111
  %v623 = vpop.f32.mrb[0].mxu0
  %v624 = vadd.f32 0.0, %v623
  %v625 = vpop.f32.mrb[0].mxu0
  %626 = vmatprep.mubr.f32.mxu0 %v225
  %627 = vmatmul.mubr.f32.gmra.mrb[0].mxu0 %v112
  %v628 = vpop.f32.mrb[0].mxu0
  %v629 = vadd.f32 0.0, %v628
  %v630 = vpop.f32.mrb[0].mxu0
  %631 = vmatprep.mubr.f32.mxu0 %v226
  %632 = vmatmul.mubr.f32.gmra.mrb[0].mxu0 %v113
  %v633 = vpop.f32.mrb[0].mxu0
  %v634 = vadd.f32 0.0, %v633
  %v635 = vpop.f32.mrb[0].mxu0
  %636 = vmatprep.mubr.f32.mxu0 %v227
  %637 = vmatmul.mubr.f32.gmra.mrb[0].mxu0 %v114
  %v638 = vpop.f32.mrb[0].mxu0
  %v639 = vadd.f32 0.0, %v638
  %v640 = vpop.f32.mrb[0].mxu0
  %641 = vmatprep.mubr.f32.mxu0 %v228
  %642 = vmatmul.mubr.f32.gmra.mrb[0].mxu0 %v115
  %v643 = vpop.f32.mrb[0].mxu0
  %v644 = vadd.f32 0.0, %v643
  %v645 = vpop.f32.mrb[0].mxu0
  %646 = vmatprep.mubr.f32.mxu0 %v229
  %647 = vmatmul.mubr.f32.gmra.mrb[0].mxu0 %v116
  %v648 = vpop.f32.mrb[0].mxu0
  %v649 = vadd.f32 0.0, %v648
  %v650 = vpop.f32.mrb[0].mxu0
  %651 = vmatprep.mubr.f32.mxu0 %v230
  %652 = vmatmul.mubr.f32.gmra.mrb[0].mxu0 %v117
  %v653 = vpop.f32.mrb[0].mxu0
  %v654 = vadd.f32 0.0, %v653
  %v655 = vpop.f32.mrb[0].mxu0
  %656 = vmatprep.mubr.f32.mxu0 %v231
  %657 = vmatmul.mubr.f32.gmra.mrb[0].mxu0 %v118
  %v658 = vpop.f32.mrb[0].mxu0
  %v659 = vadd.f32 0.0, %v658
  %v660 = vpop.f32.mrb[0].mxu0
  %661 = vmatprep.mubr.f32.mxu0 %v232
  %662 = vmatmul.mubr.f32.gmra.mrb[0].mxu0 %v119
  %v663 = vpop.f32.mrb[0].mxu0
  %v664 = vadd.f32 0.0, %v663
  %v665 = vpop.f32.mrb[0].mxu0
  %666 = vmatprep.mubr.f32.mxu0 %v233
  %667 = vmatmul.mubr.f32.gmra.mrb[0].mxu0 %v120
  %v668 = vpop.f32.mrb[0].mxu0
  %v669 = vadd.f32 0.0, %v668
  %v670 = vpop.f32.mrb[0].mxu0
  %671 = vmatprep.mubr.f32.mxu0 %v234
  %672 = vmatmul.mubr.f32.gmra.mrb[0].mxu0 %v121
  %v673 = vpop.f32.mrb[0].mxu0
  %v674 = vadd.f32 0.0, %v673
  %v675 = vpop.f32.mrb[0].mxu0
  %676 = vmatprep.mubr.f32.mxu0 %v235
  %677 = vmatmul.mubr.f32.gmra.mrb[0].mxu0 %v122
  %v678 = vpop.f32.mrb[0].mxu0
  %v679 = vadd.f32 0.0, %v678
  %v680 = vpop.f32.mrb[0].mxu0
  %681 = vmatprep.mubr.f32.mxu0 %v236
  %682 = vmatmul.mubr.f32.gmra.mrb[0].mxu0 %v123
  %v683 = vpop.f32.mrb[0].mxu0
  %v684 = vadd.f32 0.0, %v683
  %v685 = vpop.f32.mrb[0].mxu0
  %686 = vmatprep.mubr.f32.mxu0 %v237
  %687 = vmatmul.mubr.f32.gmra.mrb[0].mxu0 %v124
  %v688 = vpop.f32.mrb[0].mxu0
  %v689 = vadd.f32 0.0, %v688
  %v690 = vpop.f32.mrb[0].mxu0
  %691 = vdwg.mxu0
  %692 = vmatprep.subr.mxu0 0.0
  %693 = vmatpush1.msra.mxu0 %v496
  %694 = vmatprep.subr.mxu0 0.0
  %695 = vmatpush1.msra.mxu0 %v497
  %696 = vmatprep.subr.mxu0 0.0
  %697 = vmatpush1.msra.mxu0 %v498
  %698 = vmatprep.subr.mxu0 0.0
  %699 = vmatpush1.msra.mxu0 %v499
  %700 = vmatprep.subr.mxu0 0.0
  %701 = vmatpush1.msra.mxu0 %v500
  %702 = vmatprep.subr.mxu0 0.0
  %703 = vmatpush1.msra.mxu0 %v501
  %704 = vmatprep.subr.mxu0 0.0
  %705 = vmatpush1.msra.mxu0 %v502
  %706 = vmatprep.subr.mxu0 0.0
  %707 = vmatpush1.msra.mxu0 %v503
  %708 = vmatprep.subr.mxu0 0.0
  %709 = vmatpush1.msra.mxu0 %v504
  %710 = vmatprep.subr.mxu0 0.0
  %711 = vmatpush1.msra.mxu0 %v505
  %712 = vmatprep.subr.mxu0 0.0
  %713 = vmatpush1.msra.mxu0 %v506
  %714 = vmatprep.subr.mxu0 0.0
  %715 = vmatpush1.msra.mxu0 %v507
  %716 = vmatprep.subr.mxu0 0.0
  %717 = vmatpush1.msra.mxu0 %v508
  %718 = vmatprep.subr.mxu0 0.0
  %719 = vmatpush1.msra.mxu0 %v509
  %720 = vmatprep.subr.mxu0 0.0
  %721 = vmatpush1.msra.mxu0 %v510
  %722 = vmatprep.subr.mxu0 0.0
  %723 = vmatpush1.msra.mxu0 %v511
  %724 = vmatprep.subr.mxu0 0.0
  %725 = vmatpush1.msra.mxu0 %v512
  %726 = vmatprep.subr.mxu0 0.0
  %727 = vmatpush1.msra.mxu0 %v513
  %728 = vmatprep.subr.mxu0 0.0
  %729 = vmatpush1.msra.mxu0 %v514
  %730 = vmatprep.subr.mxu0 0.0
  %731 = vmatpush1.msra.mxu0 %v515
  %732 = vmatprep.subr.mxu0 0.0
  %733 = vmatpush1.msra.mxu0 %v516
  %734 = vmatprep.subr.mxu0 0.0
  %735 = vmatpush1.msra.mxu0 %v517
  %736 = vmatprep.subr.mxu0 0.0
  %737 = vmatpush1.msra.mxu0 %v518
  %738 = vmatprep.subr.mxu0 0.0
  %739 = vmatpush1.msra.mxu0 %v519
  %740 = vmatprep.subr.mxu0 0.0
  %741 = vmatpush1.msra.mxu0 %v520
  %742 = vmatprep.subr.mxu0 0.0
  %743 = vmatpush1.msra.mxu0 %v521
  %744 = vmatprep.subr.mxu0 0.0
  %745 = vmatpush1.msra.mxu0 %v522
  %746 = vmatprep.subr.mxu0 0.0
  %747 = vmatpush1.msra.mxu0 %v523
  %748 = vmatprep.subr.mxu0 0.0
  %749 = vmatpush1.msra.mxu0 %v524
  %750 = vmatprep.subr.mxu0 0.0
  %751 = vmatpush1.msra.mxu0 %v525
  %752 = vmatprep.subr.mxu0 0.0
  %753 = vmatpush1.msra.mxu0 %v526
  %754 = vmatprep.subr.mxu0 0.0
  %755 = vmatpush1.msra.mxu0 %v527
  %756 = vmatprep.mubr.f32.mxu0 %v448
  %757 = vmatmul.mubr.f32.gmra.mrb[0].mxu0 %v335
  %v758 = vpop.f32.mrb[0].mxu0
  %v759 = vadd.f32 %v614, %v758
  %v760 = vpop.f32.mrb[0].mxu0
  %761 = vmatprep.mubr.f32.mxu0 %v449
  %762 = vmatmul.mubr.f32.gmra.mrb[0].mxu0 %v336
  %v763 = vpop.f32.mrb[0].mxu0
  %v764 = vadd.f32 %v619, %v763
  %v765 = vpop.f32.mrb[0].mxu0
  %766 = vmatprep.mubr.f32.mxu0 %v450
  %767 = vmatmul.mubr.f32.gmra.mrb[0].mxu0 %v337
  %v768 = vpop.f32.mrb[0].mxu0
  %v769 = vadd.f32 %v624, %v768
  %v770 = vpop.f32.mrb[0].mxu0
  %771 = vmatprep.mubr.f32.mxu0 %v451
  %772 = vmatmul.mubr.f32.gmra.mrb[0].mxu0 %v338
  %v773 = vpop.f32.mrb[0].mxu0
  %v774 = vadd.f32 %v629, %v773
  %v775 = vpop.f32.mrb[0].mxu0
  %776 = vmatprep.mubr.f32.mxu0 %v452
  %777 = vmatmul.mubr.f32.gmra.mrb[0].mxu0 %v339
  %v778 = vpop.f32.mrb[0].mxu0
  %v779 = vadd.f32 %v634, %v778
  %v780 = vpop.f32.mrb[0].mxu0
  %781 = vmatprep.mubr.f32.mxu0 %v453
  %782 = vmatmul.mubr.f32.gmra.mrb[0].mxu0 %v340
  %v783 = vpop.f32.mrb[0].mxu0
  %v784 = vadd.f32 %v639, %v783
  %v785 = vpop.f32.mrb[0].mxu0
  %786 = vmatprep.mubr.f32.mxu0 %v454
  %787 = vmatmul.mubr.f32.gmra.mrb[0].mxu0 %v341
  %v788 = vpop.f32.mrb[0].mxu0
  %v789 = vadd.f32 %v644, %v788
  %v790 = vpop.f32.mrb[0].mxu0
  %791 = vmatprep.mubr.f32.mxu0 %v455
  %792 = vmatmul.mubr.f32.gmra.mrb[0].mxu0 %v342
  %v793 = vpop.f32.mrb[0].mxu0
  %v794 = vadd.f32 %v649, %v793
  %v795 = vpop.f32.mrb[0].mxu0
  %796 = vmatprep.mubr.f32.mxu0 %v456
  %797 = vmatmul.mubr.f32.gmra.mrb[0].mxu0 %v343
  %v798 = vpop.f32.mrb[0].mxu0
  %v799 = vadd.f32 %v654, %v798
  %v800 = vpop.f32.mrb[0].mxu0
  %801 = vmatprep.mubr.f32.mxu0 %v457
  %802 = vmatmul.mubr.f32.gmra.mrb[0].mxu0 %v344
  %v803 = vpop.f32.mrb[0].mxu0
  %v804 = vadd.f32 %v659, %v803
  %v805 = vpop.f32.mrb[0].mxu0
  %806 = vmatprep.mubr.f32.mxu0 %v458
  %807 = vmatmul.mubr.f32.gmra.mrb[0].mxu0 %v345
  %v808 = vpop.f32.mrb[0].mxu0
  %v809 = vadd.f32 %v664, %v808
  %v810 = vpop.f32.mrb[0].mxu0
  %811 = vmatprep.mubr.f32.mxu0 %v459
  %812 = vmatmul.mubr.f32.gmra.mrb[0].mxu0 %v346
  %v813 = vpop.f32.mrb[0].mxu0
  %v814 = vadd.f32 %v669, %v813
  %v815 = vpop.f32.mrb[0].mxu0
  %816 = vmatprep.mubr.f32.mxu0 %v460
  %817 = vmatmul.mubr.f32.gmra.mrb[0].mxu0 %v347
  %v818 = vpop.f32.mrb[0].mxu0
  %v819 = vadd.f32 %v674, %v818
  %v820 = vpop.f32.mrb[0].mxu0
  %821 = vmatprep.mubr.f32.mxu0 %v461
  %822 = vmatmul.mubr.f32.gmra.mrb[0].mxu0 %v348
  %v823 = vpop.f32.mrb[0].mxu0
  %v824 = vadd.f32 %v679, %v823
  %v825 = vpop.f32.mrb[0].mxu0
  %826 = vmatprep.mubr.f32.mxu0 %v462
  %827 = vmatmul.mubr.f32.gmra.mrb[0].mxu0 %v349
  %v828 = vpop.f32.mrb[0].mxu0
  %v829 = vadd.f32 %v684, %v828
  %v830 = vpop.f32.mrb[0].mxu0
  %831 = vmatprep.mubr.f32.mxu0 %v463
  %832 = vmatmul.mubr.f32.gmra.mrb[0].mxu0 %v350
  %v833 = vpop.f32.mrb[0].mxu0
  %v834 = vadd.f32 %v689, %v833
  %v835 = vpop.f32.mrb[0].mxu0
  %836 = vdwg.mxu0
  %v837 = vadd.f32 %v759, %v528
  %v838 = vadd.f32 %v764, %v529
  %v839 = vadd.f32 %v769, %v528
  %v840 = vadd.f32 %v774, %v529
  %v841 = vadd.f32 %v779, %v528
  %v842 = vadd.f32 %v784, %v529
  %v843 = vadd.f32 %v789, %v528
  %v844 = vadd.f32 %v794, %v529
  %v845 = vadd.f32 %v799, %v528
  %v846 = vadd.f32 %v804, %v529
  %v847 = vadd.f32 %v809, %v528
  %v848 = vadd.f32 %v814, %v529
  %v849 = vadd.f32 %v819, %v528
  %v850 = vadd.f32 %v824, %v529
  %v851 = vadd.f32 %v829, %v528
  %v852 = vadd.f32 %v834, %v529
  %v853 = vmax.f32 %v837, %v838
  %v854 = vrot.slane %v853, 4
  %v855 = vmax.f32 %v853, %v854
  %v856 = vrot.slane %v855, 2
  %v857 = vmax.f32 %v855, %v856
  %v858 = vrot.slane %v857, 1
  %v859 = vmax.f32 %v857, %v858
  %v860 = vmax.f32 %v839, %v840
  %v861 = vrot.slane %v860, 4
  %v862 = vmax.f32 %v860, %v861
  %v863 = vrot.slane %v862, 2
  %v864 = vmax.f32 %v862, %v863
  %v865 = vrot.slane %v864, 1
  %v866 = vmax.f32 %v864, %v865
  %v867 = vmax.f32 %v841, %v842
  %v868 = vrot.slane %v867, 4
  %v869 = vmax.f32 %v867, %v868
  %v870 = vrot.slane %v869, 2
  %v871 = vmax.f32 %v869, %v870
  %v872 = vrot.slane %v871, 1
  %v873 = vmax.f32 %v871, %v872
  %v874 = vmax.f32 %v843, %v844
  %v875 = vrot.slane %v874, 4
  %v876 = vmax.f32 %v874, %v875
  %v877 = vrot.slane %v876, 2
  %v878 = vmax.f32 %v876, %v877
  %v879 = vrot.slane %v878, 1
  %v880 = vmax.f32 %v878, %v879
  %v881 = vmax.f32 %v845, %v846
  %v882 = vrot.slane %v881, 4
  %v883 = vmax.f32 %v881, %v882
  %v884 = vrot.slane %v883, 2
  %v885 = vmax.f32 %v883, %v884
  %v886 = vrot.slane %v885, 1
  %v887 = vmax.f32 %v885, %v886
  %v888 = vmax.f32 %v847, %v848
  %v889 = vrot.slane %v888, 4
  %v890 = vmax.f32 %v888, %v889
  %v891 = vrot.slane %v890, 2
  %v892 = vmax.f32 %v890, %v891
  %v893 = vrot.slane %v892, 1
  %v894 = vmax.f32 %v892, %v893
  %v895 = vmax.f32 %v849, %v850
  %v896 = vrot.slane %v895, 4
  %v897 = vmax.f32 %v895, %v896
  %v898 = vrot.slane %v897, 2
  %v899 = vmax.f32 %v897, %v898
  %v900 = vrot.slane %v899, 1
  %v901 = vmax.f32 %v899, %v900
  %v902 = vmax.f32 %v851, %v852
  %v903 = vrot.slane %v902, 4
  %v904 = vmax.f32 %v902, %v903
  %v905 = vrot.slane %v904, 2
  %v906 = vmax.f32 %v904, %v905
  %v907 = vrot.slane %v906, 1
  %v908 = vmax.f32 %v906, %v907
  %v909 = vmax.f32 %v859, 0.0
  %v910 = vmax.f32 %v866, 0.0
  %v911 = vmax.f32 %v873, 0.0
  %v912 = vmax.f32 %v880, 0.0
  %v913 = vmax.f32 %v887, 0.0
  %v914 = vmax.f32 %v894, 0.0
  %v915 = vmax.f32 %v901, 0.0
  %v916 = vmax.f32 %v908, 0.0
  %v917 = vlaneseq
  %v918 = vshrl.u32 %v917, 7
  %v919 = vsub.s32 0, %v918
  %v920 = vrot.slane %v546, %v919
  %vm929 = vcmask 1041409
  %v930 = vsel %vm929, %v910, %v909
  %vm931 = vcmask 1042434
  %v932 = vsel %vm931, %v911, %v930
  %vm933 = vcmask 1043459
  %v934 = vsel %vm933, %v912, %v932
  %vm935 = vcmask 1044484
  %v936 = vsel %vm935, %v913, %v934
  %vm937 = vcmask 1045509
  %v938 = vsel %vm937, %v914, %v936
  %vm939 = vcmask 1046534
  %v940 = vsel %vm939, %v915, %v938
  %vm941 = vcmask 1047559
  %v942 = vsel %vm941, %v916, %v940
  %944 = vmatprep.subr.mxu0 0.0
  %945 = vmatpush1.msra.mxu0 %v530
  %946 = vmatprep.subr.mxu0 0.0
  %947 = vmatpush1.msra.mxu0 %v531
  %948 = vmatprep.subr.mxu0 0.0
  %949 = vmatpush1.msra.mxu0 %v532
  %950 = vmatprep.subr.mxu0 0.0
  %951 = vmatpush1.msra.mxu0 %v533
  %952 = vmatprep.subr.mxu0 0.0
  %953 = vmatpush1.msra.mxu0 %v534
  %954 = vmatprep.subr.mxu0 0.0
  %955 = vmatpush1.msra.mxu0 %v535
  %956 = vmatprep.subr.mxu0 0.0
  %957 = vmatpush1.msra.mxu0 %v536
  %958 = vmatprep.subr.mxu0 0.0
  %959 = vmatpush1.msra.mxu0 %v537
  %960 = vmatprep.subr.mxu0 0.0
  %961 = vmatpush1.msra.mxu0 %v538
  %962 = vmatprep.subr.mxu0 0.0
  %963 = vmatpush1.msra.mxu0 %v539
  %964 = vmatprep.subr.mxu0 0.0
  %965 = vmatpush1.msra.mxu0 %v540
  %966 = vmatprep.subr.mxu0 0.0
  %967 = vmatpush1.msra.mxu0 %v541
  %968 = vmatprep.subr.mxu0 0.0
  %969 = vmatpush1.msra.mxu0 %v542
  %970 = vmatprep.subr.mxu0 0.0
  %971 = vmatpush1.msra.mxu0 %v543
  %972 = vmatprep.subr.mxu0 0.0
  %973 = vmatpush1.msra.mxu0 %v544
  %974 = vmatprep.subr.mxu0 0.0
  %975 = vmatpush1.msra.mxu0 %v545
  %976 = vmatprep.subr.mxu0 0.0
  %977 = vmatpush1.msra.mxu0 0.0
  %978 = vmatprep.subr.mxu0 0.0
  %979 = vmatpush1.msra.mxu0 0.0
  %980 = vmatprep.subr.mxu0 0.0
  %981 = vmatpush1.msra.mxu0 0.0
  %982 = vmatprep.subr.mxu0 0.0
  %983 = vmatpush1.msra.mxu0 0.0
  %984 = vmatprep.subr.mxu0 0.0
  %985 = vmatpush1.msra.mxu0 0.0
  %986 = vmatprep.subr.mxu0 0.0
  %987 = vmatpush1.msra.mxu0 0.0
  %988 = vmatprep.subr.mxu0 0.0
  %989 = vmatpush1.msra.mxu0 0.0
  %990 = vmatprep.subr.mxu0 0.0
  %991 = vmatpush1.msra.mxu0 0.0
  %992 = vmatprep.subr.mxu0 0.0
  %993 = vmatpush1.msra.mxu0 0.0
  %994 = vmatprep.subr.mxu0 0.0
  %995 = vmatpush1.msra.mxu0 0.0
  %996 = vmatprep.subr.mxu0 0.0
  %997 = vmatpush1.msra.mxu0 0.0
  %998 = vmatprep.subr.mxu0 0.0
  %999 = vmatpush1.msra.mxu0 0.0
  %1000 = vmatprep.subr.mxu0 0.0
  %1001 = vmatpush1.msra.mxu0 0.0
  %1002 = vmatprep.subr.mxu0 0.0
  %1003 = vmatpush1.msra.mxu0 0.0
  %1004 = vmatprep.subr.mxu0 0.0
  %1005 = vmatpush1.msra.mxu0 0.0
  %1006 = vmatprep.subr.mxu0 0.0
  %1007 = vmatpush1.msra.mxu0 0.0
  %1008 = vmatprep.mubr.f32.mxu0 0.0
  %1009 = vmatmul.mubr.f32.gmra.mrb[0].mxu0 %v942
  %v1010 = vpop.f32.mrb[0].mxu0
  %v1011 = vadd.f32 %v920, %v1010
  %v1012 = vpop.f32.mrb[0].mxu0
  %1013 = vdwg.mxu0
  %1014 = vst [vmem:[%s2] sm:$0xff] %v1011
  // Predicated region
  $region10: #{cnn_forward_pallas.1} parent=0 // pred_check
    _
  $region11: #{cnn_forward_pallas.1} parent=0 // pred_check_branch
    %1016 = sbr.rel (0) target = $region13
  $region12: #{cnn_forward_pallas.1} parent=0 // pred_region
    _
  $region13: #{cnn_forward_pallas.1} parent=0 // pred_fallthru
    _
  // Predicated region
  $region14: #{cnn_forward_pallas.1} parent=0 // pred_check
    _
  $region15: #{cnn_forward_pallas.1} parent=0 // pred_check_branch
    %1018 = sbr.rel (0) target = $region17
  $region16: #{cnn_forward_pallas.1} parent=0 // pred_region
    _
  $region17: #{cnn_forward_pallas.1} parent=0 // pred_fallthru
    _

</llo_original>
